<compile_context>
chip_gen: v6e
topology: v6e:2x2x1
jax: 0.10.0
libtpu: 0.0.40
codegen_flags: <defaults>
</compile_context>

<pallas_src>
import jax
import jax.numpy as jnp
from jax import lax
from jax.experimental import pallas as pl
from jax.experimental.pallas import tpu as pltpu

TAU = 1.0              # temperature (module default)
REDUCTION = "mean"     # module default
COS_EPS = 1e-8         # torch.nn.functional.cosine_similarity eps
NORM_EPS = 1e-12       # torch.nn.functional.normalize eps
_INV_TAU = 1.0 / TAU


def _scale_by_inv_tau(x):
    # Fold 1/tau at trace time; no-op when tau == 1.0.
    if TAU == 1.0:
        return x
    return x * jnp.float32(_INV_TAU)


def _triplet_kernel(anchor_ref, pos_ref, neg_ref, loss_ref,
                    a_scaled_ref, cos_tau_ref, acc_ref):
    j = pl.program_id(1)

    # ---- j == 0: per-anchor-row setup (cached across the j reduction) ----
    @pl.when(j == 0)
    def _init():
        a = anchor_ref[...].astype(jnp.float32)          # (TM, D)
        p = pos_ref[...].astype(jnp.float32)             # (TM, D)

        a_ss = jnp.sum(a * a, axis=1, keepdims=True)     # (TM, 1)
        p_ss = jnp.sum(p * p, axis=1, keepdims=True)     # (TM, 1)

        # cosine_similarity(anchor, pos): dot / (max(||a||,eps)*max(||p||,eps))
        inv_a_cos = lax.rsqrt(jnp.maximum(a_ss, jnp.float32(COS_EPS * COS_EPS)))
        inv_p_cos = lax.rsqrt(jnp.maximum(p_ss, jnp.float32(COS_EPS * COS_EPS)))
        cos_ap = jnp.sum(a * p, axis=1, keepdims=True) * inv_a_cos * inv_p_cos
        cos_tau = _scale_by_inv_tau(cos_ap)              # cos / tau
        cos_tau_ref[...] = cos_tau
        acc_ref[...] = jnp.exp(cos_tau)                  # D1

        # F.normalize(anchor, dim=1), with 1/tau folded into the LHS operand
        inv_a_norm = lax.rsqrt(jnp.maximum(a_ss, jnp.float32(NORM_EPS * NORM_EPS)))
        a_scaled_ref[...] = a * _scale_by_inv_tau(inv_a_norm)

    # ---- every j: accumulate D2 over this neg block ----
    n = neg_ref[...].astype(jnp.float32)                 # (TN, D)
    n_ss = jnp.sum(n * n, axis=1, keepdims=True)         # (TN, 1)
    n_norm = n * lax.rsqrt(jnp.maximum(n_ss, jnp.float32(NORM_EPS * NORM_EPS)))

    # (a_norm @ n_norm.T) / tau, contracting on the feature axis of both
    # operands directly (no transposed copy of n_norm).
    sim_scaled = lax.dot_general(
        a_scaled_ref[...], n_norm,
        dimension_numbers=(((1,), (1,)), ((), ())),
        preferred_element_type=jnp.float32)              # (TM, TN)
    acc_ref[...] += jnp.sum(jnp.exp(sim_scaled), axis=1, keepdims=True)

    # ---- last j: finalize per-row loss ----
    @pl.when(j == pl.num_programs(1) - 1)
    def _finalize():
        # -log(D1 / (D1 + D2)) = log(D1 + D2) - log(D1) = log(acc) - cos/tau
        loss_ref[...] = jnp.log(acc_ref[...]) - cos_tau_ref[...]


def _pick_tile(b, cap):
    """Largest tile <= cap that evenly divides b (multiple of 8 preferred)."""
    for t in (512, 256, 128, 64, 32, 16, 8):
        if t <= cap and t <= b and b % t == 0:
            return t
    return b  # fall back to a full (untiled) axis; always layout-legal


def triplet_loss_cossim_v2(anchor, pos, neg, reduction=REDUCTION):
    """anchor, pos, neg: (B, D) arrays -> scalar float32 loss.

    anchor_detach is a gradient-only concern; forward values are identical,
    so it is a no-op here (forward-only kernel).
    """
    B, D = anchor.shape
    tm = _pick_tile(B, 128)   # anchor/pos rows per block
    tn = _pick_tile(B, 512)   # neg rows per block (reduction axis)
    grid = (B // tm, B // tn)

    per_row = pl.pallas_call(
        _triplet_kernel,
        out_shape=jax.ShapeDtypeStruct((B, 1), jnp.float32),
        grid_spec=pltpu.PrefetchScalarGridSpec(
            num_scalar_prefetch=0,
            grid=grid,
            in_specs=[
                pl.BlockSpec((tm, D), lambda i, j: (i, 0)),   # anchor
                pl.BlockSpec((tm, D), lambda i, j: (i, 0)),   # pos
                pl.BlockSpec((tn, D), lambda i, j: (j, 0)),   # neg
            ],
            out_specs=pl.BlockSpec((tm, 1), lambda i, j: (i, 0)),
            scratch_shapes=[
                pltpu.VMEM((tm, D), jnp.float32),   # a_norm / tau
                pltpu.VMEM((tm, 1), jnp.float32),   # cos(a,p) / tau
                pltpu.VMEM((tm, 1), jnp.float32),   # D1 + running D2
            ],
        ),
        compiler_params=pltpu.CompilerParams(
            # i (anchor rows) parallel -> megacore sharding on v7x;
            # j is the D2 reduction -> arbitrary.
            dimension_semantics=("parallel", "arbitrary"),
        ),
    )(anchor, pos, neg)

    if reduction == "mean":
        return jnp.mean(per_row)
    elif reduction == "sum":
        return jnp.sum(per_row)
    else:
        raise ValueError(f"Invalid reduction: {reduction}")


def _reference(anchor, pos, neg):
    # Pure-JAX reference mirroring the PyTorch forward exactly.
    a = anchor.astype(jnp.float32)
    p = pos.astype(jnp.float32)
    n = neg.astype(jnp.float32)
    a_l2 = jnp.linalg.norm(a, axis=1)
    p_l2 = jnp.linalg.norm(p, axis=1)
    cos = jnp.sum(a * p, axis=1) / (jnp.maximum(a_l2, COS_EPS) * jnp.maximum(p_l2, COS_EPS))
    d1 = jnp.exp(cos / TAU)
    an = a / jnp.maximum(a_l2, NORM_EPS)[:, None]
    nn = n / jnp.maximum(jnp.linalg.norm(n, axis=1), NORM_EPS)[:, None]
    d2 = jnp.sum(jnp.exp(an @ nn.T / TAU), axis=1)
    trip = -jnp.log(d1 / (d1 + d2))
    return jnp.mean(trip)


if __name__ == "__main__":
    key = jax.random.PRNGKey(0)
    k1, k2, k3 = jax.random.split(key, 3)
    B, D = 8, 32
    anchor = jax.random.normal(k1, (B, D), dtype=jnp.float32)
    pos = jax.random.normal(k2, (B, D), dtype=jnp.float32)
    neg = jax.random.normal(k3, (B, D), dtype=jnp.float32)

    loss = triplet_loss_cossim_v2(anchor, pos, neg)
    jax.block_until_ready(loss)

    ref = _reference(anchor, pos, neg)
    assert jnp.allclose(loss, ref, rtol=1e-5, atol=1e-5), (loss, ref)
    print("KERNEL_OK")
</pallas_src>

<mosaic_0001>
module attributes {stable_mosaic.version = 11 : i64} {
  func.func @_triplet_kernel(%arg0: i32, %arg1: i32, %arg2: memref<8x32xf32, #tpu.memory_space<vmem>>, %arg3: memref<8x32xf32, #tpu.memory_space<vmem>>, %arg4: memref<8x32xf32, #tpu.memory_space<vmem>>, %arg5: memref<8x1xf32, #tpu.memory_space<vmem>>, %arg6: memref<8x32xf32, #tpu.memory_space<vmem>>, %arg7: memref<8x1xf32, #tpu.memory_space<vmem>>, %arg8: memref<8x1xf32, #tpu.memory_space<vmem>>) attributes {dimension_semantics = [#tpu.dimension_semantics<parallel>, #tpu.dimension_semantics<arbitrary>], iteration_bounds = array<i64: 1, 1>, scalar_prefetch = 0 : i64, scratch_operands = 3 : i64, tpu.core_type = #tpu.core_type<tc>, window_params = [{transform_indices = @transform_0, window_bounds = array<i64: 8, 32>}, {transform_indices = @transform_1, window_bounds = array<i64: 8, 32>}, {transform_indices = @transform_2, window_bounds = array<i64: 8, 32>}, {transform_indices = @transform_3, window_bounds = array<i64: 8, 1>}]} {
    %c0_i32 = arith.constant 0 : i32
    %0 = arith.cmpi eq, %arg1, %c0_i32 : i32
    %1 = arith.extui %0 : i1 to i32
    %c0_i32_0 = arith.constant 0 : i32
    %2 = arith.cmpi ne, %1, %c0_i32_0 : i32
    scf.if %2 {
      %c0_13 = arith.constant 0 : index
      %c0_14 = arith.constant 0 : index
      %23 = vector.load %arg2[%c0_13, %c0_14] : memref<8x32xf32, #tpu.memory_space<vmem>>, vector<8x32xf32>
      %c0_15 = arith.constant 0 : index
      %c0_16 = arith.constant 0 : index
      %24 = vector.load %arg3[%c0_15, %c0_16] : memref<8x32xf32, #tpu.memory_space<vmem>>, vector<8x32xf32>
      %25 = arith.mulf %23, %23 : vector<8x32xf32>
      %cst_17 = arith.constant dense<0.000000e+00> : vector<8xf32>
      %26 = vector.multi_reduction <add>, %25, %cst_17 [1] : vector<8x32xf32> to vector<8xf32>
      %27 = vector.shape_cast %26 : vector<8xf32> to vector<8x1xf32>
      %28 = arith.mulf %24, %24 : vector<8x32xf32>
      %cst_18 = arith.constant dense<0.000000e+00> : vector<8xf32>
      %29 = vector.multi_reduction <add>, %28, %cst_18 [1] : vector<8x32xf32> to vector<8xf32>
      %30 = vector.shape_cast %29 : vector<8xf32> to vector<8x1xf32>
      %cst_19 = arith.constant 1.000000e-16 : f32
      %31 = vector.broadcast %cst_19 : f32 to vector<8x1xf32>
      %32 = arith.maximumf %27, %31 : vector<8x1xf32>
      %33 = math.rsqrt %32 : vector<8x1xf32>
      %cst_20 = arith.constant 1.000000e-16 : f32
      %34 = vector.broadcast %cst_20 : f32 to vector<8x1xf32>
      %35 = arith.maximumf %30, %34 : vector<8x1xf32>
      %36 = math.rsqrt %35 : vector<8x1xf32>
      %37 = arith.mulf %23, %24 : vector<8x32xf32>
      %cst_21 = arith.constant dense<0.000000e+00> : vector<8xf32>
      %38 = vector.multi_reduction <add>, %37, %cst_21 [1] : vector<8x32xf32> to vector<8xf32>
      %39 = vector.shape_cast %38 : vector<8xf32> to vector<8x1xf32>
      %40 = arith.mulf %39, %33 : vector<8x1xf32>
      %41 = arith.mulf %40, %36 : vector<8x1xf32>
      %c0_22 = arith.constant 0 : index
      %c0_23 = arith.constant 0 : index
      %42 = vector.load %arg7[%c0_22, %c0_23] : memref<8x1xf32, #tpu.memory_space<vmem>>, vector<8x1xf32>
      tpu.vector_store %arg7[%c0_22, %c0_23], %41 {strides = array<i32>} : memref<8x1xf32, #tpu.memory_space<vmem>>, vector<8x1xf32>,
      %43 = math.exp %41 : vector<8x1xf32>
      %c0_24 = arith.constant 0 : index
      %c0_25 = arith.constant 0 : index
      %44 = vector.load %arg8[%c0_24, %c0_25] : memref<8x1xf32, #tpu.memory_space<vmem>>, vector<8x1xf32>
      tpu.vector_store %arg8[%c0_24, %c0_25], %43 {strides = array<i32>} : memref<8x1xf32, #tpu.memory_space<vmem>>, vector<8x1xf32>,
      %cst_26 = arith.constant 1.000000e-24 : f32
      %45 = vector.broadcast %cst_26 : f32 to vector<8x1xf32>
      %46 = arith.maximumf %27, %45 : vector<8x1xf32>
      %47 = math.rsqrt %46 : vector<8x1xf32>
      %48 = vector.broadcast %47 : vector<8x1xf32> to vector<8x32xf32>
      %49 = arith.mulf %23, %48 : vector<8x32xf32>
      %c0_27 = arith.constant 0 : index
      %c0_28 = arith.constant 0 : index
      %50 = vector.load %arg6[%c0_27, %c0_28] : memref<8x32xf32, #tpu.memory_space<vmem>>, vector<8x32xf32>
      tpu.vector_store %arg6[%c0_27, %c0_28], %49 {strides = array<i32>} : memref<8x32xf32, #tpu.memory_space<vmem>>, vector<8x32xf32>,
    } else {
    }
    %c0 = arith.constant 0 : index
    %c0_1 = arith.constant 0 : index
    %3 = vector.load %arg4[%c0, %c0_1] : memref<8x32xf32, #tpu.memory_space<vmem>>, vector<8x32xf32>
    %4 = arith.mulf %3, %3 : vector<8x32xf32>
    %cst = arith.constant dense<0.000000e+00> : vector<8xf32>
    %5 = vector.multi_reduction <add>, %4, %cst [1] : vector<8x32xf32> to vector<8xf32>
    %6 = vector.shape_cast %5 : vector<8xf32> to vector<8x1xf32>
    %cst_2 = arith.constant 1.000000e-24 : f32
    %7 = vector.broadcast %cst_2 : f32 to vector<8x1xf32>
    %8 = arith.maximumf %6, %7 : vector<8x1xf32>
    %9 = math.rsqrt %8 : vector<8x1xf32>
    %10 = vector.broadcast %9 : vector<8x1xf32> to vector<8x32xf32>
    %11 = arith.mulf %3, %10 : vector<8x32xf32>
    %c0_3 = arith.constant 0 : index
    %c0_4 = arith.constant 0 : index
    %12 = vector.load %arg6[%c0_3, %c0_4] : memref<8x32xf32, #tpu.memory_space<vmem>>, vector<8x32xf32>
    %cst_5 = arith.constant dense<0.000000e+00> : vector<8x8xf32>
    %13 = tpu.matmul %12, %11, %cst_5 {dimension_numbers = #tpu.dot_dimension_numbers<[1], [1], [0], [0], [0, 0, 1, 0], [], []>} : vector<8x32xf32>, vector<8x32xf32>, vector<8x8xf32> -> vector<8x8xf32>
    %c0_6 = arith.constant 0 : index
    %c0_7 = arith.constant 0 : index
    %14 = vector.load %arg8[%c0_6, %c0_7] : memref<8x1xf32, #tpu.memory_space<vmem>>, vector<8x1xf32>
    %15 = math.exp %13 : vector<8x8xf32>
    %cst_8 = arith.constant dense<0.000000e+00> : vector<8xf32>
    %16 = vector.multi_reduction <add>, %15, %cst_8 [1] : vector<8x8xf32> to vector<8xf32>
    %17 = vector.shape_cast %16 : vector<8xf32> to vector<8x1xf32>
    %18 = arith.addf %14, %17 : vector<8x1xf32>
    %c0_9 = arith.constant 0 : index
    %c0_10 = arith.constant 0 : index
    %19 = vector.load %arg8[%c0_9, %c0_10] : memref<8x1xf32, #tpu.memory_space<vmem>>, vector<8x1xf32>
    tpu.vector_store %arg8[%c0_9, %c0_10], %18 {strides = array<i32>} : memref<8x1xf32, #tpu.memory_space<vmem>>, vector<8x1xf32>,
    %c0_i32_11 = arith.constant 0 : i32
    %20 = arith.cmpi eq, %arg1, %c0_i32_11 : i32
    %21 = arith.extui %20 : i1 to i32
    %c0_i32_12 = arith.constant 0 : i32
    %22 = arith.cmpi ne, %21, %c0_i32_12 : i32
    scf.if %22 {
      %c0_13 = arith.constant 0 : index
      %c0_14 = arith.constant 0 : index
      %23 = vector.load %arg8[%c0_13, %c0_14] : memref<8x1xf32, #tpu.memory_space<vmem>>, vector<8x1xf32>
      %24 = math.log %23 : vector<8x1xf32>
      %c0_15 = arith.constant 0 : index
      %c0_16 = arith.constant 0 : index
      %25 = vector.load %arg7[%c0_15, %c0_16] : memref<8x1xf32, #tpu.memory_space<vmem>>, vector<8x1xf32>
      %26 = arith.subf %24, %25 : vector<8x1xf32>
      %c0_17 = arith.constant 0 : index
      %c0_18 = arith.constant 0 : index
      %27 = vector.load %arg5[%c0_17, %c0_18] : memref<8x1xf32, #tpu.memory_space<vmem>>, vector<8x1xf32>
      tpu.vector_store %arg5[%c0_17, %c0_18], %26 {strides = array<i32>} : memref<8x1xf32, #tpu.memory_space<vmem>>, vector<8x1xf32>,
    } else {
    }
    return
  }
  func.func @transform_0(%arg0: i32, %arg1: i32) -> (i32, i32) {
    %c0_i32 = arith.constant 0 : i32
    %c0_i32_0 = arith.constant 0 : i32
    return %arg0, %c0_i32 : i32, i32
  }
  func.func @transform_1(%arg0: i32, %arg1: i32) -> (i32, i32) {
    %c0_i32 = arith.constant 0 : i32
    %c0_i32_0 = arith.constant 0 : i32
    return %arg0, %c0_i32 : i32, i32
  }
  func.func @transform_2(%arg0: i32, %arg1: i32) -> (i32, i32) {
    %c0_i32 = arith.constant 0 : i32
    %c0_i32_0 = arith.constant 0 : i32
    return %arg1, %c0_i32 : i32, i32
  }
  func.func @transform_3(%arg0: i32, %arg1: i32) -> (i32, i32) {
    %c0_i32 = arith.constant 0 : i32
    %c0_i32_0 = arith.constant 0 : i32
    return %arg0, %c0_i32 : i32, i32
  }
}

</mosaic_0001>

<llo_original>
// kernel: tpu_custom_call.1
$region0: #{tpu_custom_call.1}
  #allocation0 [shape = 'u32[]', space=smem, size = 0x4, offset = 0x4, fixed_abs, tag = 'smem constant byte address 0x4 - core index']
  #allocation1 [shape = 'u32[144,128]{1,0:T(1,128)}', space=vmem, size = 0x12000, scoped, tag = 'internal scratch']
  #allocation2 [shape = 'f32[8,32]{1,0:T(8,128)}', space=vmem, size = 0x1000, scoped, tag = 'scratch operand']
  #allocation3 [shape = 'f32[8,1]{1,0:T(8,128)}', space=vmem, size = 0x1000, scoped, tag = 'scratch operand']
  #allocation4 [shape = 'f32[8,1]{1,0:T(8,128)}', space=vmem, size = 0x1000, scoped, tag = 'scratch operand']
  %s0 = inlined_call_operand.hbm [shape: f32[8,32], index: 0, kind: input, shape index: {}]
  %s1 = inlined_call_operand.hbm [shape: f32[8,32], index: 1, kind: input, shape index: {}]
  %s2 = inlined_call_operand.hbm [shape: f32[8,32], index: 2, kind: input, shape index: {}]
  %s3 = inlined_call_operand.vmem [shape: f32[8,1], index: 3, kind: output, shape index: {}]
  %s4 = sld [smem:[#allocation0]]
  $region42: #{tpu_custom_call.1} parent=0
    _
  %s6 = ssub.s32 1, %s4
  %s7 = scalar_select 0, %s6, %s4
  $region1: #{tpu_custom_call.1} parent=0
    #allocation5 [shape = 'u8[4096]{0}', space=vmem, size = 0x1000, scoped, tag = 'input window, operand 0, single buffered']
    #allocation6 [shape = 's32[1]{0}', space=sflag, size = 0x4, scoped, tag = 'scoped memory for tpu_custom_call.1']
    #allocation7 [shape = 'u8[4096]{0}', space=vmem, size = 0x1000, scoped, tag = 'input window, operand 1, single buffered']
    #allocation8 [shape = 's32[1]{0}', space=sflag, size = 0x4, scoped, tag = 'scoped memory for tpu_custom_call.1']
    #allocation9 [shape = 'u8[4096]{0}', space=vmem, size = 0x1000, scoped, tag = 'input window, operand 2, single buffered']
    %8 = vsyncpa [#allocation6], 0
    %9 = vsyncpa [#allocation8], 0
    // Predicated region
    $region2: #{tpu_custom_call.1} parent=1 // pred_check
      _
    $region3: #{tpu_custom_call.1} parent=1 // pred_check_branch
      %11 = sbr.rel (0) target = $region5
    $region4: #{tpu_custom_call.1} parent=1 // pred_region
      %s13 = ssub.s32 128, 128
      %14 = vsyncadd [#allocation6], %s13
      %s16 = sshll.u32 [#allocation5], 4
      %s17 = int_to_ptr.vmem [resolvable:$true] %s16
      %19 = dma.hbm_to_vmem [thread:$0]  %s0, 128, %s17, [#allocation6]
    $region5: #{tpu_custom_call.1} parent=1 // pred_fallthru
      _
    // Predicated region
    $region6: #{tpu_custom_call.1} parent=1 // pred_check
      _
    $region7: #{tpu_custom_call.1} parent=1 // pred_check_branch
      %21 = sbr.rel (0) target = $region9
    $region8: #{tpu_custom_call.1} parent=1 // pred_region
      %s23 = ssub.s32 128, 128
      %24 = vsyncadd [#allocation8], %s23
      %s26 = sshll.u32 [#allocation7], 4
      %s27 = int_to_ptr.vmem [resolvable:$true] %s26
      %29 = dma.hbm_to_vmem [thread:$0]  %s1, 128, %s27, [#allocation8]
    $region9: #{tpu_custom_call.1} parent=1 // pred_fallthru
      _
    // Predicated region
    $region10: #{tpu_custom_call.1} parent=1 // pred_check
      _
    $region11: #{tpu_custom_call.1} parent=1 // pred_check_branch
      %31 = sbr.rel (0) target = $region13
    $region12: #{tpu_custom_call.1} parent=1 // pred_region
      %s33 = ssub.s32 128, 128
      %34 = vsyncadd [#allocation8], %s33
      %s36 = sshll.u32 [#allocation9], 4
      %s37 = int_to_ptr.vmem [resolvable:$true] %s36
      %39 = dma.hbm_to_vmem [thread:$0]  %s2, 128, %s37, [#allocation8]
    $region13: #{tpu_custom_call.1} parent=1 // pred_fallthru
      _
    // Predicated region
    $region14: #{tpu_custom_call.1} parent=1 // pred_check
      _
    $region15: #{tpu_custom_call.1} parent=1 // pred_check_branch
      %41 = sbr.rel (0) target = $region17
    $region16: #{tpu_custom_call.1} parent=1 // pred_region
      %42 = dma.done [#allocation6], 128
    $region17: #{tpu_custom_call.1} parent=1 // pred_fallthru
      _
    // Predicated region
    $region18: #{tpu_custom_call.1} parent=1 // pred_check
      _
    $region19: #{tpu_custom_call.1} parent=1 // pred_check_branch
      %44 = sbr.rel (0) target = $region21
    $region20: #{tpu_custom_call.1} parent=1 // pred_region
      %45 = dma.done [#allocation8], 128
    $region21: #{tpu_custom_call.1} parent=1 // pred_fallthru
      _
    // Predicated region
    $region22: #{tpu_custom_call.1} parent=1 // pred_check
      _
    $region23: #{tpu_custom_call.1} parent=1 // pred_check_branch
      %47 = sbr.rel (0) target = $region25
    $region24: #{tpu_custom_call.1} parent=1 // pred_region
      %48 = dma.done [#allocation8], 128
    $region25: #{tpu_custom_call.1} parent=1 // pred_fallthru
      _
    %p49 = scmp.eq.s32.totalorder 0, 0
    // Predicated region
    $region26: #{tpu_custom_call.1} parent=1 // pred_check
      %p50 = pneg %p49
    $region27: #{tpu_custom_call.1} parent=1 // pred_check_branch
      %52 = sbr.rel (%p50) target = $region29
    $region28: #{tpu_custom_call.1} parent=1 // pred_region
      %v53 = vld [vmem:[#allocation5] sm:$0xff]
      %v54 = vld [vmem:[#allocation7] sm:$0xff]
      %v55 = vmul.f32 %v53, %v53
      %vm56 = vcmask 261120
      %v57 = vsel %vm56, %v55, 0.0
      %58 = vadd.xlane.f32.xlu0 %v57
      %v59 = vpop.xlane.xlu0 %58
      %v60 = vmul.f32 %v54, %v54
      %v61 = vsel %vm56, %v60, 0.0
      %62 = vadd.xlane.f32.xlu0 %v61
      %v63 = vpop.xlane.xlu0 %62
      %v64 = vmax.f32 %v59, 1e-16
      %v65 = vrsqrt.pop %v64
      %v66 = vmax.f32 %v63, 1e-16
      %v67 = vrsqrt.pop %v66
      %v68 = vmul.f32 %v53, %v54
      %v69 = vsel %vm56, %v68, 0.0
      %70 = vadd.xlane.f32.xlu0 %v69
      %v71 = vpop.xlane.xlu0 %70
      %v72 = vmul.f32 %v71, %v65
      %v73 = vmul.f32 %v72, %v67
      %vm74 = vcmask 7168
      %75 = vst.msk [vmem:[#allocation3] sm:$0xff] %vm74, %v73
      %v76 = vmul.f32 %v73, 1.442695
      %v77 = vpow.pop %v76
      %78 = vst.msk [vmem:[#allocation4] sm:$0xff] %vm74, %v77
      %v79 = vmax.f32 %v59, 1e-24
      %v80 = vrsqrt.pop %v79
      %v81 = vmul.f32 %v53, %v80
      %82 = vst.msk [vmem:[#allocation2] sm:$0xff] %vm56, %v81
    $region29: #{tpu_custom_call.1} parent=1 // pred_fallthru
      _
    %v83 = vld [vmem:[#allocation9] sm:$0xff]
    %v84 = vmul.f32 %v83, %v83
    %vm85 = vcmask 261120
    %v86 = vsel %vm85, %v84, 0.0
    %87 = vadd.xlane.f32.xlu0 %v86
    %v88 = vpop.xlane.xlu0 %87
    %v89 = vmax.f32 %v88, 1e-24
    %v90 = vrsqrt.pop %v89
    %v91 = vmul.f32 %v83, %v90
    %v92 = vld [vmem:[#allocation2] sm:$0xff]
    %v94 = vsel %vm85, %v92, 0
    %v97 = vsel %vm85, %v91, 0
    %99 = vmatprep.subr.mxu0 0.0
    %100 = vmatpush1.xpose.msra.mxu0 0.0
    %101 = vmatprep.subr.mxu0 0.0
    %102 = vmatpush1.xpose.msra.mxu0 0.0
    %103 = vmatprep.subr.mxu0 0.0
    %104 = vmatpush1.xpose.msra.mxu0 0.0
    %105 = vmatprep.subr.mxu0 0.0
    %106 = vmatpush1.xpose.msra.mxu0 0.0
    %107 = vmatprep.subr.mxu0 0.0
    %108 = vmatpush1.xpose.msra.mxu0 0.0
    %109 = vmatprep.subr.mxu0 0.0
    %110 = vmatpush1.xpose.msra.mxu0 0.0
    %111 = vmatprep.subr.mxu0 0.0
    %112 = vmatpush1.xpose.msra.mxu0 0.0
    %113 = vmatprep.subr.mxu0 0.0
    %114 = vmatpush1.xpose.msra.mxu0 0.0
    %115 = vmatprep.subr.mxu0 0.0
    %116 = vmatpush1.xpose.msra.mxu0 0.0
    %117 = vmatprep.subr.mxu0 0.0
    %118 = vmatpush1.xpose.msra.mxu0 0.0
    %119 = vmatprep.subr.mxu0 0.0
    %120 = vmatpush1.xpose.msra.mxu0 0.0
    %121 = vmatprep.subr.mxu0 0.0
    %122 = vmatpush1.xpose.msra.mxu0 0.0
    %123 = vmatprep.subr.mxu0 0.0
    %124 = vmatpush1.xpose.msra.mxu0 0.0
    %125 = vmatprep.subr.mxu0 0.0
    %126 = vmatpush1.xpose.msra.mxu0 0.0
    %127 = vmatprep.subr.mxu0 0.0
    %128 = vmatpush1.xpose.msra.mxu0 0.0
    %129 = vmatprep.subr.mxu0 0.0
    %130 = vmatpush1.xpose.msra.mxu0 %v97
    %131 = vmatprep.subr.mxu0 0.0
    %132 = vmatpush2.xpose.msra.mxu0 0.0
    %133 = vmatprep.subr.mxu0 0.0
    %134 = vmatpush2.xpose.msra.mxu0 0.0
    %135 = vmatprep.subr.mxu0 0.0
    %136 = vmatpush2.xpose.msra.mxu0 0.0
    %137 = vmatprep.subr.mxu0 0.0
    %138 = vmatpush2.xpose.msra.mxu0 0.0
    %139 = vmatprep.subr.mxu0 0.0
    %140 = vmatpush2.xpose.msra.mxu0 0.0
    %141 = vmatprep.subr.mxu0 0.0
    %142 = vmatpush2.xpose.msra.mxu0 0.0
    %143 = vmatprep.subr.mxu0 0.0
    %144 = vmatpush2.xpose.msra.mxu0 0.0
    %145 = vmatprep.subr.mxu0 0.0
    %146 = vmatpush2.xpose.msra.mxu0 0.0
    %147 = vmatprep.subr.mxu0 0.0
    %148 = vmatpush2.xpose.msra.mxu0 0.0
    %149 = vmatprep.subr.mxu0 0.0
    %150 = vmatpush2.xpose.msra.mxu0 0.0
    %151 = vmatprep.subr.mxu0 0.0
    %152 = vmatpush2.xpose.msra.mxu0 0.0
    %153 = vmatprep.subr.mxu0 0.0
    %154 = vmatpush2.xpose.msra.mxu0 0.0
    %155 = vmatprep.subr.mxu0 0.0
    %156 = vmatpush2.xpose.msra.mxu0 0.0
    %157 = vmatprep.subr.mxu0 0.0
    %158 = vmatpush2.xpose.msra.mxu0 0.0
    %159 = vmatprep.subr.mxu0 0.0
    %160 = vmatpush2.xpose.msra.mxu0 0.0
    %161 = vmatprep.subr.mxu0 0.0
    %162 = vmatpush2.xpose.msra.mxu0 0.0
    %163 = vmatprep.mubr.f32.mxu0 0.0
    %164 = vmatmul.mubr.f32.gmra.mxu0 %v94
    %v165 = vpop.f32.mrf.mxu0
    %v166 = vadd.f32 0.0, %v165
    %v167 = vpop.f32.mrf.mxu0
    %168 = vdwg.mxu0
    %v169 = vld [vmem:[#allocation4] sm:$0xff]
    %v170 = vmul.f32 %v166, 1.442695
    %v171 = vpow.pop %v170
    %vm172 = vcmask 64512
    %v173 = vsel %vm172, %v171, 0.0
    %174 = vadd.xlane.f32.xlu0 %v173
    %v175 = vpop.xlane.xlu0 %174
    %v176 = vadd.f32 %v169, %v175
    %vm177 = vcmask 7168
    %178 = vst.msk [vmem:[#allocation4] sm:$0xff] %vm177, %v176
    // Predicated region
    $region30: #{tpu_custom_call.1} parent=1 // pred_check
      %p179 = pneg %p49
    $region31: #{tpu_custom_call.1} parent=1 // pred_check_branch
      %181 = sbr.rel (%p179) target = $region33
    $region32: #{tpu_custom_call.1} parent=1 // pred_region
      %v182 = vld [vmem:[#allocation4] sm:$0xff]
      %v183 = vlog2.pop %v182
      %v184 = vmul.f32 %v183, 0.6931472
      %v185 = vld [vmem:[#allocation3] sm:$0xff]
      %v186 = vsub.f32 %v184, %v185
      %187 = vst.msk [vmem:[%s3] sm:$0xff] %vm177, %v186
    $region33: #{tpu_custom_call.1} parent=1 // pred_fallthru
      _
    // Predicated region
    $region34: #{tpu_custom_call.1} parent=1 // pred_check
      _
    $region35: #{tpu_custom_call.1} parent=1 // pred_check_branch
      %189 = sbr.rel (0) target = $region37
    $region36: #{tpu_custom_call.1} parent=1 // pred_region
      _
    $region37: #{tpu_custom_call.1} parent=1 // pred_fallthru
      _
    // Predicated region
    $region38: #{tpu_custom_call.1} parent=1 // pred_check
      _
    $region39: #{tpu_custom_call.1} parent=1 // pred_check_branch
      %191 = sbr.rel (0) target = $region41
    $region40: #{tpu_custom_call.1} parent=1 // pred_region
      _
    $region41: #{tpu_custom_call.1} parent=1 // pred_fallthru
      _
    %192 = vsyncpa [#allocation6], 1
    %193 = vsyncpa [#allocation8], 1

</llo_original>
